<compile_context>
chip_gen: v7x
topology: tpu7x:2x2x1
jax: 0.10.0
libtpu: 0.0.40
codegen_flags: <defaults>
</compile_context>

<pallas_src>
import jax
import jax.numpy as jnp
from jax.experimental import pallas as pl
from jax.experimental.pallas import tpu as pltpu


def mlp_kernel(x_ref, w1_ref, b1_ref, w2_ref, b2_ref, o_ref):
    # x_ref:  (TB, obs)      streamed batch tile
    # w1_ref: (obs, H)       VMEM-resident
    # b1_ref: (1, H)         VMEM-resident
    # w2_ref: (H, A)         VMEM-resident
    # b2_ref: (1, A)         VMEM-resident
    # o_ref:  (TB, A)        un-padded logits tile
    h = jnp.dot(x_ref[...], w1_ref[...], preferred_element_type=jnp.float32)
    h = jnp.maximum(h + b1_ref[...], 0.0)                       # bias + ReLU on VPU
    out = jnp.dot(h, w2_ref[...], preferred_element_type=jnp.float32) + b2_ref[...]
    o_ref[...] = out.astype(o_ref.dtype)


def _round_up(x, m):
    return ((x + m - 1) // m) * m


def prepare_net_params(w1, b1, w2, b2):
    """One-time (per policy-update) parameter prep; keep out of the rollout hot path.

    w1: (obs_size, hidden)   -- PyTorch nn.Linear weight transposed
    b1: (hidden,) or (1, hidden)
    w2: (hidden, n_actions)  -- PyTorch nn.Linear weight transposed
    b2: (n_actions,) or (1, n_actions)
    """
    H = w1.shape[1]
    A = w2.shape[1]
    return (
        jnp.asarray(w1, jnp.float32),
        jnp.asarray(b1, jnp.float32).reshape(1, H),
        jnp.asarray(w2, jnp.float32),
        jnp.asarray(b2, jnp.float32).reshape(1, A),
    )


def net_forward(x, params, *, block_b=2048):
    """Pallas forward pass of the two-layer MLP.

    x: (B, obs_size) float32; params from prepare_net_params().
    Returns (B, n_actions) float32 logits.
    """
    w1, b1, w2, b2 = params
    B, obs = x.shape
    H = w1.shape[1]
    A = w2.shape[1]

    # --- batch tile selection -------------------------------------------------
    block_b = max(128, _round_up(block_b, 128))     # keep tiles lane/sublane friendly
    if B > block_b:
        TB = block_b                                 # multiple of 128
    elif B >= 256:
        # big enough to care about v7x's two TensorCores: force >= 2 grid steps
        TB = _round_up(pl.cdiv(B, 2), 128)
    else:
        TB = _round_up(B, 8)                         # single tile == full array dim
    B_pad = _round_up(B, TB)
    x_in = x if B_pad == B else jnp.pad(x, ((0, B_pad - B), (0, 0)))
    nb = B_pad // TB

    out = pl.pallas_call(
        mlp_kernel,
        out_shape=jax.ShapeDtypeStruct((B_pad, A), jnp.float32),
        grid=(nb,),
        in_specs=[
            pl.BlockSpec((TB, obs), lambda i: (i, 0)),   # streamed batch tiles
            pl.BlockSpec((obs, H), lambda i: (0, 0)),    # weights stay VMEM-resident
            pl.BlockSpec((1, H), lambda i: (0, 0)),
            pl.BlockSpec((H, A), lambda i: (0, 0)),
            pl.BlockSpec((1, A), lambda i: (0, 0)),
        ],
        out_specs=pl.BlockSpec((TB, A), lambda i: (i, 0)),
        compiler_params=pltpu.CompilerParams(
            dimension_semantics=("parallel",),           # shard batch tiles across TCs (v7x)
        ),
    )(x_in, w1, b1, w2, b2)

    return out if B_pad == B else out[:B]


def init_linear_params(key, in_features, out_features):
    """Deterministic init mimicking torch.nn.Linear defaults (uniform +/- 1/sqrt(in))."""
    kw, kb = jax.random.split(key)
    bound = 1.0 / jnp.sqrt(jnp.float32(in_features))
    # stored as (in, out) = PyTorch (out, in) transposed
    w = jax.random.uniform(kw, (in_features, out_features), jnp.float32, -bound, bound)
    b = jax.random.uniform(kb, (1, out_features), jnp.float32, -bound, bound)
    return w, b


if __name__ == "__main__":
    # CartPole-like sizes: obs_size=4, hidden_size=32, n_actions=2, batch=8
    obs_size, hidden_size, n_actions, batch = 4, 32, 2, 8

    key = jax.random.PRNGKey(0)
    k_x, k_l1, k_l2, k_x2 = jax.random.split(key, 4)

    x = jax.random.normal(k_x, (batch, obs_size), dtype=jnp.float32)
    w1, b1 = init_linear_params(k_l1, obs_size, hidden_size)
    w2, b2 = init_linear_params(k_l2, hidden_size, n_actions)

    params = prepare_net_params(w1, b1, w2, b2)   # one-time prep (per policy update)

    logits = net_forward(x, params)
    jax.block_until_ready(logits)

    # Reference check in plain JAX (same math as the PyTorch module).
    ref = jnp.maximum(x @ w1 + b1, 0.0) @ w2 + b2
    assert logits.shape == (batch, n_actions)
    assert jnp.allclose(logits, ref, atol=1e-5, rtol=1e-5)

    # Ragged-batch path (B not a multiple of 8): pads to the tile, slices back.
    x2 = jax.random.normal(k_x2, (20, obs_size), dtype=jnp.float32)
    logits2 = net_forward(x2, params)
    jax.block_until_ready(logits2)
    ref2 = jnp.maximum(x2 @ w1 + b1, 0.0) @ w2 + b2
    assert logits2.shape == (20, n_actions)
    assert jnp.allclose(logits2, ref2, atol=1e-5, rtol=1e-5)

    print("KERNEL_OK")
</pallas_src>

<mosaic_0001>
module attributes {stable_mosaic.version = 11 : i64} {
  func.func @mlp_kernel(%arg0: i32, %arg1: memref<8x4xf32, #tpu.memory_space<vmem>>, %arg2: memref<4x32xf32, #tpu.memory_space<vmem>>, %arg3: memref<1x32xf32, #tpu.memory_space<vmem>>, %arg4: memref<32x2xf32, #tpu.memory_space<vmem>>, %arg5: memref<1x2xf32, #tpu.memory_space<vmem>>, %arg6: memref<8x2xf32, #tpu.memory_space<vmem>>) attributes {dimension_semantics = [#tpu.dimension_semantics<parallel>], iteration_bounds = array<i64: 1>, scalar_prefetch = 0 : i64, scratch_operands = 0 : i64, tpu.core_type = #tpu.core_type<tc>, window_params = [{transform_indices = @transform_0, window_bounds = array<i64: 8, 4>}, {pipeline_mode = #tpu.pipeline_mode<synchronous>, transform_indices = @transform_1, window_bounds = array<i64: 4, 32>}, {pipeline_mode = #tpu.pipeline_mode<synchronous>, transform_indices = @transform_2, window_bounds = array<i64: 1, 32>}, {pipeline_mode = #tpu.pipeline_mode<synchronous>, transform_indices = @transform_3, window_bounds = array<i64: 32, 2>}, {pipeline_mode = #tpu.pipeline_mode<synchronous>, transform_indices = @transform_4, window_bounds = array<i64: 1, 2>}, {transform_indices = @transform_5, window_bounds = array<i64: 8, 2>}]} {
    %c0 = arith.constant 0 : index
    %c0_0 = arith.constant 0 : index
    %0 = vector.load %arg1[%c0, %c0_0] : memref<8x4xf32, #tpu.memory_space<vmem>>, vector<8x4xf32>
    %c0_1 = arith.constant 0 : index
    %c0_2 = arith.constant 0 : index
    %1 = vector.load %arg2[%c0_1, %c0_2] : memref<4x32xf32, #tpu.memory_space<vmem>>, vector<4x32xf32>
    %cst = arith.constant dense<0.000000e+00> : vector<8x32xf32>
    %2 = tpu.matmul %0, %1, %cst {dimension_numbers = #tpu.dot_dimension_numbers<[1], [0], [0], [1], [0, 0, 1, 1], [], []>} : vector<8x4xf32>, vector<4x32xf32>, vector<8x32xf32> -> vector<8x32xf32>
    %c0_3 = arith.constant 0 : index
    %c0_4 = arith.constant 0 : index
    %3 = vector.load %arg3[%c0_3, %c0_4] : memref<1x32xf32, #tpu.memory_space<vmem>>, vector<1x32xf32>
    %4 = vector.broadcast %3 : vector<1x32xf32> to vector<8x32xf32>
    %5 = arith.addf %2, %4 : vector<8x32xf32>
    %cst_5 = arith.constant 0.000000e+00 : f32
    %6 = vector.broadcast %cst_5 : f32 to vector<8x32xf32>
    %7 = arith.maximumf %5, %6 : vector<8x32xf32>
    %c0_6 = arith.constant 0 : index
    %c0_7 = arith.constant 0 : index
    %8 = vector.load %arg4[%c0_6, %c0_7] : memref<32x2xf32, #tpu.memory_space<vmem>>, vector<32x2xf32>
    %cst_8 = arith.constant dense<0.000000e+00> : vector<8x2xf32>
    %9 = tpu.matmul %7, %8, %cst_8 {dimension_numbers = #tpu.dot_dimension_numbers<[1], [0], [0], [1], [0, 0, 1, 1], [], []>} : vector<8x32xf32>, vector<32x2xf32>, vector<8x2xf32> -> vector<8x2xf32>
    %c0_9 = arith.constant 0 : index
    %c0_10 = arith.constant 0 : index
    %10 = vector.load %arg5[%c0_9, %c0_10] : memref<1x2xf32, #tpu.memory_space<vmem>>, vector<1x2xf32>
    %11 = vector.broadcast %10 : vector<1x2xf32> to vector<8x2xf32>
    %12 = arith.addf %9, %11 : vector<8x2xf32>
    %c0_11 = arith.constant 0 : index
    %c0_12 = arith.constant 0 : index
    %13 = vector.load %arg6[%c0_11, %c0_12] : memref<8x2xf32, #tpu.memory_space<vmem>>, vector<8x2xf32>
    tpu.vector_store %arg6[%c0_11, %c0_12], %12 {strides = array<i32>} : memref<8x2xf32, #tpu.memory_space<vmem>>, vector<8x2xf32>,
    return
  }
  func.func @transform_0(%arg0: i32) -> (i32, i32) {
    %c0_i32 = arith.constant 0 : i32
    %c0_i32_0 = arith.constant 0 : i32
    return %arg0, %c0_i32 : i32, i32
  }
  func.func @transform_1(%arg0: i32) -> (i32, i32) {
    %c0_i32 = arith.constant 0 : i32
    %c0_i32_0 = arith.constant 0 : i32
    %c0_i32_1 = arith.constant 0 : i32
    return %c0_i32, %c0_i32_0 : i32, i32
  }
  func.func @transform_2(%arg0: i32) -> (i32, i32) {
    %c0_i32 = arith.constant 0 : i32
    %c0_i32_0 = arith.constant 0 : i32
    %c0_i32_1 = arith.constant 0 : i32
    return %c0_i32, %c0_i32_0 : i32, i32
  }
  func.func @transform_3(%arg0: i32) -> (i32, i32) {
    %c0_i32 = arith.constant 0 : i32
    %c0_i32_0 = arith.constant 0 : i32
    %c0_i32_1 = arith.constant 0 : i32
    return %c0_i32, %c0_i32_0 : i32, i32
  }
  func.func @transform_4(%arg0: i32) -> (i32, i32) {
    %c0_i32 = arith.constant 0 : i32
    %c0_i32_0 = arith.constant 0 : i32
    %c0_i32_1 = arith.constant 0 : i32
    return %c0_i32, %c0_i32_0 : i32, i32
  }
  func.func @transform_5(%arg0: i32) -> (i32, i32) {
    %c0_i32 = arith.constant 0 : i32
    %c0_i32_0 = arith.constant 0 : i32
    return %arg0, %c0_i32 : i32, i32
  }
}

</mosaic_0001>

<llo_original>
// kernel: tpu_custom_call.1
$region0: #{tpu_custom_call.1}
  #allocation0 [shape = 'u32[]', space=smem, size = 0x4, offset = 0x4, fixed_abs, tag = 'smem constant byte address 0x4 - core index']
  #allocation1 [shape = 'u32[144,128]{1,0:T(1,128)}', space=vmem, size = 0x12000, scoped, tag = 'internal scratch']
  %s0 = inlined_call_operand.vmem [shape: f32[8,4], index: 0, kind: input, shape index: {}]
  %s1 = inlined_call_operand.vmem [shape: f32[4,32], index: 1, kind: input, shape index: {}]
  %s2 = inlined_call_operand.vmem [shape: f32[1,32], index: 2, kind: input, shape index: {}]
  %s3 = inlined_call_operand.vmem [shape: f32[32,2], index: 3, kind: input, shape index: {}]
  %s4 = inlined_call_operand.vmem [shape: f32[1,2], index: 4, kind: input, shape index: {}]
  %s5 = inlined_call_operand.vmem [shape: f32[8,2], index: 5, kind: output, shape index: {}]
  %s6 = sld [smem:[#allocation0]]
  $region30: #{tpu_custom_call.1} parent=0
    _
  %s8 = ssub.s32 1, %s6
  %s9 = scalar_select 0, %s8, %s6
  // Predicated region
  $region2: #{tpu_custom_call.1} parent=0 // pred_check
    _
  $region3: #{tpu_custom_call.1} parent=0 // pred_check_branch
    %11 = sbr.rel (0) target = $region5
  $region4: #{tpu_custom_call.1} parent=0 // pred_region
    _
  $region5: #{tpu_custom_call.1} parent=0 // pred_fallthru
    _
  // Predicated region
  $region6: #{tpu_custom_call.1} parent=0 // pred_check
    _
  $region7: #{tpu_custom_call.1} parent=0 // pred_check_branch
    %13 = sbr.rel (0) target = $region9
  $region8: #{tpu_custom_call.1} parent=0 // pred_region
    _
  $region9: #{tpu_custom_call.1} parent=0 // pred_fallthru
    _
  // Predicated region
  $region10: #{tpu_custom_call.1} parent=0 // pred_check
    _
  $region11: #{tpu_custom_call.1} parent=0 // pred_check_branch
    %15 = sbr.rel (0) target = $region13
  $region12: #{tpu_custom_call.1} parent=0 // pred_region
    _
  $region13: #{tpu_custom_call.1} parent=0 // pred_fallthru
    _
  // Predicated region
  $region14: #{tpu_custom_call.1} parent=0 // pred_check
    _
  $region15: #{tpu_custom_call.1} parent=0 // pred_check_branch
    %17 = sbr.rel (0) target = $region17
  $region16: #{tpu_custom_call.1} parent=0 // pred_region
    _
  $region17: #{tpu_custom_call.1} parent=0 // pred_fallthru
    _
  // Predicated region
  $region18: #{tpu_custom_call.1} parent=0 // pred_check
    _
  $region19: #{tpu_custom_call.1} parent=0 // pred_check_branch
    %19 = sbr.rel (0) target = $region21
  $region20: #{tpu_custom_call.1} parent=0 // pred_region
    _
  $region21: #{tpu_custom_call.1} parent=0 // pred_fallthru
    _
  %v20 = vld [vmem:[%s0] sm:$0xff]
  %v21 = vld [vmem:[%s1] sm:$0xf]
  %v22 = vld [vmem:[%s2] sm:$0x1]
  %v24 = vlaneseq
  %v25 = vshrl.u32 %v24, 7
  %v26 = vsub.s32 0, %v25
  %v27 = vrot.slane %v22, %v26
  %vm29 = vcmask 31744
  %v31 = vsel %vm29, %v20, 0
  %vm33 = vcmask 1043456
  %v35 = vsel %vm33, %v21, 0
  %37 = vmatprep.subr.mxu0 0.0
  %38 = vmatpush1.msra.mxu0 %v35
  %39 = vmatprep.subr.mxu0 0.0
  %40 = vmatpush1.msra.mxu0 0.0
  %41 = vmatprep.subr.mxu0 0.0
  %42 = vmatpush1.msra.mxu0 0.0
  %43 = vmatprep.subr.mxu0 0.0
  %44 = vmatpush1.msra.mxu0 0.0
  %45 = vmatprep.subr.mxu0 0.0
  %46 = vmatpush1.msra.mxu0 0.0
  %47 = vmatprep.subr.mxu0 0.0
  %48 = vmatpush1.msra.mxu0 0.0
  %49 = vmatprep.subr.mxu0 0.0
  %50 = vmatpush1.msra.mxu0 0.0
  %51 = vmatprep.subr.mxu0 0.0
  %52 = vmatpush1.msra.mxu0 0.0
  %53 = vmatprep.subr.mxu0 0.0
  %54 = vmatpush1.msra.mxu0 0.0
  %55 = vmatprep.subr.mxu0 0.0
  %56 = vmatpush1.msra.mxu0 0.0
  %57 = vmatprep.subr.mxu0 0.0
  %58 = vmatpush1.msra.mxu0 0.0
  %59 = vmatprep.subr.mxu0 0.0
  %60 = vmatpush1.msra.mxu0 0.0
  %61 = vmatprep.subr.mxu0 0.0
  %62 = vmatpush1.msra.mxu0 0.0
  %63 = vmatprep.subr.mxu0 0.0
  %64 = vmatpush1.msra.mxu0 0.0
  %65 = vmatprep.subr.mxu0 0.0
  %66 = vmatpush1.msra.mxu0 0.0
  %67 = vmatprep.subr.mxu0 0.0
  %68 = vmatpush1.msra.mxu0 0.0
  %69 = vmatprep.subr.mxu0 0.0
  %70 = vmatpush1.msra.mxu0 0.0
  %71 = vmatprep.subr.mxu0 0.0
  %72 = vmatpush1.msra.mxu0 0.0
  %73 = vmatprep.subr.mxu0 0.0
  %74 = vmatpush1.msra.mxu0 0.0
  %75 = vmatprep.subr.mxu0 0.0
  %76 = vmatpush1.msra.mxu0 0.0
  %77 = vmatprep.subr.mxu0 0.0
  %78 = vmatpush1.msra.mxu0 0.0
  %79 = vmatprep.subr.mxu0 0.0
  %80 = vmatpush1.msra.mxu0 0.0
  %81 = vmatprep.subr.mxu0 0.0
  %82 = vmatpush1.msra.mxu0 0.0
  %83 = vmatprep.subr.mxu0 0.0
  %84 = vmatpush1.msra.mxu0 0.0
  %85 = vmatprep.subr.mxu0 0.0
  %86 = vmatpush1.msra.mxu0 0.0
  %87 = vmatprep.subr.mxu0 0.0
  %88 = vmatpush1.msra.mxu0 0.0
  %89 = vmatprep.subr.mxu0 0.0
  %90 = vmatpush1.msra.mxu0 0.0
  %91 = vmatprep.subr.mxu0 0.0
  %92 = vmatpush1.msra.mxu0 0.0
  %93 = vmatprep.subr.mxu0 0.0
  %94 = vmatpush1.msra.mxu0 0.0
  %95 = vmatprep.subr.mxu0 0.0
  %96 = vmatpush1.msra.mxu0 0.0
  %97 = vmatprep.subr.mxu0 0.0
  %98 = vmatpush1.msra.mxu0 0.0
  %99 = vmatprep.subr.mxu0 0.0
  %100 = vmatpush1.msra.mxu0 0.0
  %101 = vmatprep.mubr.f32.mxu0 0.0
  %102 = vmatmul.mubr.f32.gmra.mrb[0].mxu0 %v31
  %v103 = vpop.f32.mrb[0].mxu0
  %v104 = vadd.f32 %v27, %v103
  %v105 = vpop.f32.mrb[0].mxu0
  %106 = vdwg.mxu0
  %v107 = vmax.f32 %v104, 0.0
  %v108 = vld [vmem:[%s3] sm:$0xff]
  %v109 = vld [vmem:[%s3 + $0x8] sm:$0xff]
  %v110 = vld [vmem:[%s3 + $0x10] sm:$0xff]
  %v111 = vld [vmem:[%s3 + $0x18] sm:$0xff]
  %v112 = vld [vmem:[%s4] sm:$0x1]
  %v114 = vlaneseq
  %v115 = vshrl.u32 %v114, 7
  %v116 = vsub.s32 0, %v115
  %v117 = vrot.slane %v112, %v116
  %vm119 = vcmask 261120
  %v121 = vsel %vm119, %v107, 0
  %123 = vmatprep.subr.mxu0 0.0
  %124 = vmatpush1.msra.mxu0 %v108
  %125 = vmatprep.subr.mxu0 0.0
  %126 = vmatpush1.msra.mxu0 %v109
  %127 = vmatprep.subr.mxu0 0.0
  %128 = vmatpush1.msra.mxu0 %v110
  %129 = vmatprep.subr.mxu0 0.0
  %130 = vmatpush1.msra.mxu0 %v111
  %131 = vmatprep.subr.mxu0 0.0
  %132 = vmatpush1.msra.mxu0 0.0
  %133 = vmatprep.subr.mxu0 0.0
  %134 = vmatpush1.msra.mxu0 0.0
  %135 = vmatprep.subr.mxu0 0.0
  %136 = vmatpush1.msra.mxu0 0.0
  %137 = vmatprep.subr.mxu0 0.0
  %138 = vmatpush1.msra.mxu0 0.0
  %139 = vmatprep.subr.mxu0 0.0
  %140 = vmatpush1.msra.mxu0 0.0
  %141 = vmatprep.subr.mxu0 0.0
  %142 = vmatpush1.msra.mxu0 0.0
  %143 = vmatprep.subr.mxu0 0.0
  %144 = vmatpush1.msra.mxu0 0.0
  %145 = vmatprep.subr.mxu0 0.0
  %146 = vmatpush1.msra.mxu0 0.0
  %147 = vmatprep.subr.mxu0 0.0
  %148 = vmatpush1.msra.mxu0 0.0
  %149 = vmatprep.subr.mxu0 0.0
  %150 = vmatpush1.msra.mxu0 0.0
  %151 = vmatprep.subr.mxu0 0.0
  %152 = vmatpush1.msra.mxu0 0.0
  %153 = vmatprep.subr.mxu0 0.0
  %154 = vmatpush1.msra.mxu0 0.0
  %155 = vmatprep.subr.mxu0 0.0
  %156 = vmatpush1.msra.mxu0 0.0
  %157 = vmatprep.subr.mxu0 0.0
  %158 = vmatpush1.msra.mxu0 0.0
  %159 = vmatprep.subr.mxu0 0.0
  %160 = vmatpush1.msra.mxu0 0.0
  %161 = vmatprep.subr.mxu0 0.0
  %162 = vmatpush1.msra.mxu0 0.0
  %163 = vmatprep.subr.mxu0 0.0
  %164 = vmatpush1.msra.mxu0 0.0
  %165 = vmatprep.subr.mxu0 0.0
  %166 = vmatpush1.msra.mxu0 0.0
  %167 = vmatprep.subr.mxu0 0.0
  %168 = vmatpush1.msra.mxu0 0.0
  %169 = vmatprep.subr.mxu0 0.0
  %170 = vmatpush1.msra.mxu0 0.0
  %171 = vmatprep.subr.mxu0 0.0
  %172 = vmatpush1.msra.mxu0 0.0
  %173 = vmatprep.subr.mxu0 0.0
  %174 = vmatpush1.msra.mxu0 0.0
  %175 = vmatprep.subr.mxu0 0.0
  %176 = vmatpush1.msra.mxu0 0.0
  %177 = vmatprep.subr.mxu0 0.0
  %178 = vmatpush1.msra.mxu0 0.0
  %179 = vmatprep.subr.mxu0 0.0
  %180 = vmatpush1.msra.mxu0 0.0
  %181 = vmatprep.subr.mxu0 0.0
  %182 = vmatpush1.msra.mxu0 0.0
  %183 = vmatprep.subr.mxu0 0.0
  %184 = vmatpush1.msra.mxu0 0.0
  %185 = vmatprep.subr.mxu0 0.0
  %186 = vmatpush1.msra.mxu0 0.0
  %187 = vmatprep.mubr.f32.mxu0 0.0
  %188 = vmatmul.mubr.f32.gmra.mrb[0].mxu0 %v121
  %v189 = vpop.f32.mrb[0].mxu0
  %v190 = vadd.f32 %v117, %v189
  %v191 = vpop.f32.mrb[0].mxu0
  %192 = vdwg.mxu0
  %vm193 = vcmask 15360
  %194 = vst.msk [vmem:[%s5] sm:$0xff] %vm193, %v190
  // Predicated region
  $region22: #{tpu_custom_call.1} parent=0 // pred_check
    _
  $region23: #{tpu_custom_call.1} parent=0 // pred_check_branch
    %196 = sbr.rel (0) target = $region25
  $region24: #{tpu_custom_call.1} parent=0 // pred_region
    _
  $region25: #{tpu_custom_call.1} parent=0 // pred_fallthru
    _
  // Predicated region
  $region26: #{tpu_custom_call.1} parent=0 // pred_check
    _
  $region27: #{tpu_custom_call.1} parent=0 // pred_check_branch
    %198 = sbr.rel (0) target = $region29
  $region28: #{tpu_custom_call.1} parent=0 // pred_region
    _
  $region29: #{tpu_custom_call.1} parent=0 // pred_fallthru
    _

</llo_original>
